<compile_context>
chip_gen: v6e
topology: v6e:2x2x1
jax: 0.10.0
libtpu: 0.0.40
codegen_flags: <defaults>
</compile_context>

<pallas_src>
import functools

import jax
import jax.numpy as jnp
from jax.experimental import pallas as pl
from jax.experimental.pallas import tpu as pltpu

_LANE = 128


def _ce_label_smooth_kernel(logits_ref, targets_ref, partial_ref, *,
                            on_coef, off_coef, n_total, block_rows, ragged):
    x = logits_ref[...].astype(jnp.float32)              # (TB, C), f32 math
    t = targets_ref[...]                                  # (TB, 1) int32
    tb, c = x.shape

    # Numerically stable log-softmax pieces; never materialize log_probs,
    # one-hot, or the smoothed-target matrix.
    m = jnp.max(x, axis=1, keepdims=True)                                 # (TB, 1)
    shifted = x - m                                                       # (TB, C)
    lse = jnp.log(jnp.sum(jnp.exp(shifted), axis=1, keepdims=True))       # (TB, 1)

    # Fused smoothed-target reduction:
    #   coef_c = eps/C + (1-eps)*[c == t]   ->   loss_row = lse - sum_c coef_c*shifted_c
    cls_ids = jax.lax.broadcasted_iota(jnp.int32, (tb, c), 1)
    coef = jnp.where(cls_ids == t, on_coef, off_coef)                     # (TB, C)
    smooth_dot = jnp.sum(shifted * coef, axis=1, keepdims=True)           # (TB, 1)
    loss_row = lse - smooth_dot                                           # (TB, 1)

    if ragged:
        # Only the final block can contain padded rows; zero their (garbage)
        # per-row results.  The select blocks NaN/Inf leakage and all the
        # reductions above are per-row, so valid rows are unaffected.
        i = pl.program_id(0)
        row_ids = i * block_rows + jax.lax.broadcasted_iota(jnp.int32, (tb, 1), 0)
        loss_row = jnp.where(row_ids < n_total, loss_row, 0.0)

    partial = jnp.sum(loss_row)                                           # scalar
    # Lane-dense (8, 128) output tile; the wrapper reads one element per block.
    partial_ref[...] = jnp.broadcast_to(partial, partial_ref.shape)


def _round_up(x, m):
    return ((x + m - 1) // m) * m


def _sublane_multiple(itemsize):
    # f32 -> 8, bf16 -> 16, int8/fp8 -> 32 sublanes per packed vreg.
    return max(8, 32 // max(1, int(itemsize)))


def _pick_block_rows(n, c, itemsize):
    """Size TB against the true VMEM working set per block:
       2 double-buffered native-dtype logits blocks + ~4 live f32 (TB, Cpad)
       intermediates, with C padded to the 128-lane tile."""
    c_pad = _round_up(c, _LANE)
    sub = _sublane_multiple(itemsize)
    per_row = c_pad * (2 * itemsize + 4 * 4)
    budget = 28 * 1024 * 1024
    tb = max(sub, (budget // per_row) // sub * sub)
    if tb >= n:
        # Prefer >= 2 blocks so the "parallel" grid axis can feed both v7x
        # TensorCores; falls back to a single full-batch block for tiny n.
        half = _round_up(-(-n // 2), sub)
        if half < n:
            return int(half)
        return int(n)
    return int(tb)


def _vmem_limit_bytes(tb, c, itemsize):
    c_pad = _round_up(c, _LANE)
    est = (2 * tb * c_pad * itemsize      # double-buffered logits stream
           + 4 * tb * c_pad * 4           # live f32 (TB, Cpad) intermediates
           + 2 * tb * _LANE * 4           # targets buffers (lane-padded)
           + 2 * 8 * _LANE * 4            # output tiles
           + (2 << 20))                   # compiler-scratch slack
    return int(min(max(est, 32 << 20), 48 << 20))


def cross_entropy_label_smooth(logits, targets, *, num_classes, epsilon,
                               block_rows=None):
    """logits: (N, C) float (f32/bf16); targets: (N,) int class ids. -> scalar f32."""
    n, c = logits.shape
    assert c == num_classes
    itemsize = logits.dtype.itemsize
    targets2d = targets.astype(jnp.int32).reshape(n, 1)

    if block_rows is None:
        tb = _pick_block_rows(n, c, itemsize)
    else:
        tb = int(block_rows)
        if tb >= n:
            tb = int(n)
        else:
            tb = max(8, (tb // 8) * 8)    # (8,128) legality for partial blocks
    num_blocks = pl.cdiv(n, tb)
    ragged = (n % tb) != 0

    on_coef = 1.0 - float(epsilon) + float(epsilon) / float(num_classes)
    off_coef = float(epsilon) / float(num_classes)

    kernel = functools.partial(
        _ce_label_smooth_kernel,
        on_coef=on_coef, off_coef=off_coef,
        n_total=int(n), block_rows=int(tb), ragged=bool(ragged))

    cost = pl.CostEstimate(
        flops=6 * n * c,
        transcendentals=n * c + n,
        bytes_accessed=n * c * itemsize + n * 4 + num_blocks * 8 * _LANE * 4)

    partials = pl.pallas_call(
        kernel,
        out_shape=jax.ShapeDtypeStruct((num_blocks * 8, _LANE), jnp.float32),
        grid=(num_blocks,),
        in_specs=[
            pl.BlockSpec((tb, c), lambda i: (i, 0)),
            pl.BlockSpec((tb, 1), lambda i: (i, 0)),
        ],
        out_specs=pl.BlockSpec((8, _LANE), lambda i: (i, 0)),
        compiler_params=pltpu.CompilerParams(
            dimension_semantics=("parallel",),
            vmem_limit_bytes=_vmem_limit_bytes(tb, c, itemsize)),
        cost_estimate=cost,
    )(logits, targets2d)

    # Exactly one partial per block at rows 0, 8, 16, ..., lane 0.
    return jnp.sum(partials[0::8, 0]) / jnp.float32(n)
    # TODO(synk): for tiny / non-128-multiple C, pad C to a lane multiple in HBM
    # (or put the batch on the lane axis); for LM-vocab-sized C, add a second
    # "arbitrary" class-axis grid dimension with an online logsumexp.


def _reference(logits, targets, num_classes, epsilon):
    log_probs = jax.nn.log_softmax(logits.astype(jnp.float32), axis=1)
    onehot = jax.nn.one_hot(targets, num_classes, dtype=jnp.float32)
    smooth = (1.0 - epsilon) * onehot + epsilon / num_classes
    return (-smooth * log_probs).mean(0).sum()


if __name__ == "__main__":
    num_classes = 10
    epsilon = 0.1

    key = jax.random.PRNGKey(0)
    k1, k2, k3, k4 = jax.random.split(key, 4)

    # 1) Small f32 case (single block).
    logits = jax.random.normal(k1, (8, num_classes), dtype=jnp.float32)
    targets = jax.random.randint(k2, (8,), 0, num_classes, dtype=jnp.int32)
    loss = cross_entropy_label_smooth(
        logits, targets, num_classes=num_classes, epsilon=epsilon)
    jax.block_until_ready(loss)
    ref = _reference(logits, targets, num_classes, epsilon)
    assert jnp.allclose(loss, ref, atol=1e-5, rtol=1e-5), (loss, ref)

    # 2) Ragged batch with a forced small block -> grid of 2, masked tail rows.
    logits_r = jax.random.normal(k3, (13, num_classes), dtype=jnp.float32)
    targets_r = jax.random.randint(k4, (13,), 0, num_classes, dtype=jnp.int32)
    loss_r = cross_entropy_label_smooth(
        logits_r, targets_r, num_classes=num_classes, epsilon=epsilon,
        block_rows=8)
    jax.block_until_ready(loss_r)
    ref_r = _reference(logits_r, targets_r, num_classes, epsilon)
    assert jnp.allclose(loss_r, ref_r, atol=1e-5, rtol=1e-5), (loss_r, ref_r)

    # 3) bf16 logits streamed natively (no wrapper cast), f32 math in-kernel.
    logits_b = logits.astype(jnp.bfloat16)
    loss_b = cross_entropy_label_smooth(
        logits_b, targets, num_classes=num_classes, epsilon=epsilon)
    jax.block_until_ready(loss_b)
    ref_b = _reference(logits_b, targets, num_classes, epsilon)
    assert jnp.allclose(loss_b, ref_b, atol=1e-4, rtol=1e-4), (loss_b, ref_b)

    print("KERNEL_OK")
</pallas_src>

<mosaic_0001>
module attributes {stable_mosaic.version = 11 : i64} {
  func.func @_ce_label_smooth_kernel(%arg0: i32, %arg1: memref<8x10xf32, #tpu.memory_space<vmem>>, %arg2: memref<8x1xi32, #tpu.memory_space<vmem>>, %arg3: memref<8x128xf32, #tpu.memory_space<vmem>>) attributes {dimension_semantics = [#tpu.dimension_semantics<parallel>], iteration_bounds = array<i64: 1>, scalar_prefetch = 0 : i64, scratch_operands = 0 : i64, tpu.core_type = #tpu.core_type<tc>, window_params = [{transform_indices = @transform_0, window_bounds = array<i64: 8, 10>}, {transform_indices = @transform_1, window_bounds = array<i64: 8, 1>}, {transform_indices = @transform_2, window_bounds = array<i64: 8, 128>}]} {
    %c0 = arith.constant 0 : index
    %c0_0 = arith.constant 0 : index
    %0 = vector.load %arg1[%c0, %c0_0] : memref<8x10xf32, #tpu.memory_space<vmem>>, vector<8x10xf32>
    %c0_1 = arith.constant 0 : index
    %c0_2 = arith.constant 0 : index
    %1 = vector.load %arg2[%c0_1, %c0_2] : memref<8x1xi32, #tpu.memory_space<vmem>>, vector<8x1xi32>
    %cst = arith.constant dense<0xFF800000> : vector<8xf32>
    %2 = vector.multi_reduction <maximumf>, %0, %cst [1] : vector<8x10xf32> to vector<8xf32>
    %3 = vector.shape_cast %2 : vector<8xf32> to vector<8x1xf32>
    %4 = vector.broadcast %3 : vector<8x1xf32> to vector<8x10xf32>
    %5 = arith.subf %0, %4 : vector<8x10xf32>
    %6 = math.exp %5 : vector<8x10xf32>
    %cst_3 = arith.constant dense<0.000000e+00> : vector<8xf32>
    %7 = vector.multi_reduction <add>, %6, %cst_3 [1] : vector<8x10xf32> to vector<8xf32>
    %8 = vector.shape_cast %7 : vector<8xf32> to vector<8x1xf32>
    %9 = math.log %8 : vector<8x1xf32>
    %10 = tpu.iota {dimensions = array<i32: 1>} : vector<8x10xi32>
    %11 = vector.broadcast %1 : vector<8x1xi32> to vector<8x10xi32>
    %12 = arith.cmpi eq, %10, %11 : vector<8x10xi32>
    %cst_4 = arith.constant 9.100000e-01 : f32
    %cst_5 = arith.constant 0.00999999977 : f32
    %13 = vector.broadcast %cst_4 : f32 to vector<8x10xf32>
    %14 = vector.broadcast %cst_5 : f32 to vector<8x10xf32>
    %15 = arith.select %12, %13, %14 : vector<8x10xi1>, vector<8x10xf32>
    %16 = arith.mulf %5, %15 : vector<8x10xf32>
    %cst_6 = arith.constant dense<0.000000e+00> : vector<8xf32>
    %17 = vector.multi_reduction <add>, %16, %cst_6 [1] : vector<8x10xf32> to vector<8xf32>
    %18 = vector.shape_cast %17 : vector<8xf32> to vector<8x1xf32>
    %19 = arith.subf %9, %18 : vector<8x1xf32>
    %20 = vector.shape_cast %19 : vector<8x1xf32> to vector<1x8x1xf32>
    %cst_7 = arith.constant dense<0.000000e+00> : vector<1xf32>
    %21 = vector.multi_reduction <add>, %20, %cst_7 [1, 2] : vector<1x8x1xf32> to vector<1xf32>
    %22 = vector.shape_cast %21 : vector<1xf32> to vector<1x1x1xf32>
    %23 = vector.extract %22[0, 0, 0] : f32 from vector<1x1x1xf32>
    %24 = vector.broadcast %23 : f32 to vector<8x128xf32>
    %c0_8 = arith.constant 0 : index
    %c0_9 = arith.constant 0 : index
    %25 = vector.load %arg3[%c0_8, %c0_9] : memref<8x128xf32, #tpu.memory_space<vmem>>, vector<8x128xf32>
    tpu.vector_store %arg3[%c0_8, %c0_9], %24 {strides = array<i32>} : memref<8x128xf32, #tpu.memory_space<vmem>>, vector<8x128xf32>,
    return
  }
  func.func @transform_0(%arg0: i32) -> (i32, i32) {
    %c0_i32 = arith.constant 0 : i32
    %c0_i32_0 = arith.constant 0 : i32
    return %arg0, %c0_i32 : i32, i32
  }
  func.func @transform_1(%arg0: i32) -> (i32, i32) {
    %c0_i32 = arith.constant 0 : i32
    %c0_i32_0 = arith.constant 0 : i32
    return %arg0, %c0_i32 : i32, i32
  }
  func.func @transform_2(%arg0: i32) -> (i32, i32) {
    %c0_i32 = arith.constant 0 : i32
    %c0_i32_0 = arith.constant 0 : i32
    return %arg0, %c0_i32 : i32, i32
  }
}

</mosaic_0001>

<llo_original>
// kernel: tpu_custom_call.1
$region0: #{tpu_custom_call.1}
  #allocation0 [shape = 'u32[]', space=smem, size = 0x4, offset = 0x4, fixed_abs, tag = 'smem constant byte address 0x4 - core index']
  #allocation1 [shape = 'u32[144,128]{1,0:T(1,128)}', space=vmem, size = 0x12000, scoped, tag = 'internal scratch']
  %s0 = inlined_call_operand.vmem [shape: f32[8,10], index: 0, kind: input, shape index: {}]
  %s1 = inlined_call_operand.vmem [shape: s32[8,1], index: 1, kind: input, shape index: {}]
  %s2 = inlined_call_operand.hbm [shape: f32[8,128], index: 2, kind: output, shape index: {}]
  %s3 = sld [smem:[#allocation0]]
  $region18: #{tpu_custom_call.1} parent=0
    _
  %s5 = ssub.s32 1, %s3
  %s6 = scalar_select 0, %s5, %s3
  $region1: #{tpu_custom_call.1} parent=0
    #allocation2 [shape = 'u8[4096]{0}', space=vmem, size = 0x1000, scoped, tag = 'output window, operand 0, single buffered']
    #allocation3 [shape = 's32[1]{0}', space=sflag, size = 0x4, scoped, tag = 'scoped memory for tpu_custom_call.1']
    %7 = vsyncpa [#allocation3], 0
    // Predicated region
    $region2: #{tpu_custom_call.1} parent=1 // pred_check
      _
    $region3: #{tpu_custom_call.1} parent=1 // pred_check_branch
      %9 = sbr.rel (0) target = $region5
    $region4: #{tpu_custom_call.1} parent=1 // pred_region
      _
    $region5: #{tpu_custom_call.1} parent=1 // pred_fallthru
      _
    // Predicated region
    $region6: #{tpu_custom_call.1} parent=1 // pred_check
      _
    $region7: #{tpu_custom_call.1} parent=1 // pred_check_branch
      %11 = sbr.rel (0) target = $region9
    $region8: #{tpu_custom_call.1} parent=1 // pred_region
      _
    $region9: #{tpu_custom_call.1} parent=1 // pred_fallthru
      _
    %v12 = vld [vmem:[%s0] sm:$0xff]
    %v13 = vld [vmem:[%s1] sm:$0xff]
    %vm14 = vcmask 80896
    %v15 = vsel %vm14, %v12, -inf
    %16 = vmax.xlane.f32.xlu0 %v15
    %v17 = vpop.xlane.xlu0 %16
    %v18 = vsub.f32 %v12, %v17
    %v19 = vmul.f32 %v18, 1.442695
    %v20 = vpow.pop %v19
    %v21 = vsel %vm14, %v20, 0.0
    %22 = vadd.xlane.f32.xlu0 %v21
    %v23 = vpop.xlane.xlu0 %22
    %v24 = vlog2.pop %v23
    %v25 = vmul.f32 %v24, 0.6931472
    %v26 = vlaneseq
    %v27 = vand.u32 %v26, 127
    %28 = vset.pattern.permute.xlu0 0
    %29 = vperm.xlu0 %28, %v13
    %v30 = vpop.permute.xlu0 %29
    %vm31 = vcmp.eq.s32.totalorder %v27, %v30
    %v32 = vsel %vm31, 0.91, 0.01
    %v33 = vmul.f32 %v18, %v32
    %v34 = vsel %vm14, %v33, 0.0
    %35 = vadd.xlane.f32.xlu0 %v34
    %v36 = vpop.xlane.xlu0 %35
    %v37 = vsub.f32 %v25, %v36
    %vm38 = vcmask 7168
    %v39 = vsel %vm38, %v37, 0.0
    %40 = vadd.xlane.f32.xlu0 %v39
    %v41 = vpop.xlane.xlu0 %40
    %v42 = vrot.slane %v41, 4
    %v43 = vadd.f32 %v41, %v42
    %v44 = vrot.slane %v43, 2
    %v45 = vadd.f32 %v43, %v44
    %v46 = vrot.slane %v45, 1
    %v47 = vadd.f32 %v45, %v46
    %s48 = vtos %v47
    %v49 = vstv %s48
    %50 = vst [vmem:[#allocation2] sm:$0xff] %v49
    // Predicated region
    $region10: #{tpu_custom_call.1} parent=1 // pred_check
      _
    $region11: #{tpu_custom_call.1} parent=1 // pred_check_branch
      %52 = sbr.rel (0) target = $region13
    $region12: #{tpu_custom_call.1} parent=1 // pred_region
      %s54 = ssub.s32 128, 128
      %55 = vsyncadd [#allocation3], %s54
      %s57 = sshll.u32 [#allocation2], 4
      %s58 = int_to_ptr.vmem [resolvable:$true] %s57
      %60 = dma.vmem_to_hbm [thread:$0]  %s58, 128, %s2, [#allocation3]
    $region13: #{tpu_custom_call.1} parent=1 // pred_fallthru
      _
    // Predicated region
    $region14: #{tpu_custom_call.1} parent=1 // pred_check
      _
    $region15: #{tpu_custom_call.1} parent=1 // pred_check_branch
      %62 = sbr.rel (0) target = $region17
    $region16: #{tpu_custom_call.1} parent=1 // pred_region
      %63 = dma.done [#allocation3], 128
    $region17: #{tpu_custom_call.1} parent=1 // pred_fallthru
      _
    %64 = vsyncpa [#allocation3], 1

</llo_original>
